<compile_context>
chip_gen: v5e
topology: v5e:2x2
jax: 0.10.0
libtpu: 0.0.40
codegen_flags: <defaults>
</compile_context>

<pallas_src>
import functools

import jax
import jax.numpy as jnp
from jax import lax
from jax.experimental import pallas as pl
from jax.experimental.pallas import tpu as pltpu

LN_EPS = 1e-5  # torch.nn.LayerNorm default


def _round_up(v, m):
    return ((v + m - 1) // m) * m


def _prenorm_linear_kernel(x_ref, gamma_ref, beta_ref, w_ref, b_ref, o_ref,
                           xn_ref):
    """LayerNorm (f32 stats + f32 affine) cached once per row tile, then
    xn @ W + b for each output-column tile."""
    # LayerNorm hoisted out of the j loop: compute only on the first column
    # tile of each row tile; the scratch carries across j (j is 'arbitrary',
    # so the row tile i — and hence the cached xn — is fixed while j sweeps).
    @pl.when(pl.program_id(1) == 0)
    def _():
        x = x_ref[...].astype(jnp.float32)                          # (TM, D)
        mean = jnp.mean(x, axis=-1, keepdims=True)
        centered = x - mean
        var = jnp.mean(centered * centered, axis=-1, keepdims=True)  # biased, like torch
        xn = centered * lax.rsqrt(var + LN_EPS)
        xn = xn * gamma_ref[...].astype(jnp.float32) \
             + beta_ref[...].astype(jnp.float32)                    # affine in f32
        xn_ref[...] = xn.astype(xn_ref.dtype)

    # MXU: operands in mm_dtype (bf16 for bf16 inputs), f32 accumulation.
    out = jnp.dot(xn_ref[...], w_ref[...], preferred_element_type=jnp.float32)
    out = out + b_ref[...].astype(jnp.float32)                      # (1, TN) bias
    o_ref[...] = out.astype(o_ref.dtype)


@functools.partial(jax.jit, static_argnames=("tile_m", "tile_n"))
def prenorm_linear(x, gamma, beta, w, b, *, tile_m=512, tile_n=512):
    """PreNorm(dim, Linear(dim, d_out))(x) for x of shape (B, N, D)."""
    B, N, D = x.shape
    D_out = w.shape[1]
    M = B * N
    x2 = x.reshape(M, D)

    # MXU operand dtype: bf16 inputs -> bf16 matmul (full MXU rate). f32 inputs
    # keep f32 operands for tight accuracy (runs at the reduced f32 MXU rate).
    mm_dtype = x.dtype
    w_mm = w.astype(mm_dtype)                 # no-op when dtypes already match
    gamma2 = gamma.reshape(1, D)
    beta2 = beta.reshape(1, D)
    b2 = b.astype(jnp.float32).reshape(1, D_out)

    # Tile sizes: large by default (per-step overhead ~0.35us and repeated W
    # streaming make small tiles overhead/HBM-bound); clamp to the
    # sublane-rounded problem so small shapes still satisfy the (8,128) rule.
    tm = min(tile_m, _round_up(M, 8))
    tn = min(tile_n, D_out)
    # Guarantee >= 2 tiles on the 'parallel' row axis when possible so both
    # v7x TensorCores (megacore) get work.
    if pl.cdiv(M, tm) == 1 and M >= 16:
        tm = _round_up(pl.cdiv(M, 2), 8)
    grid = (pl.cdiv(M, tm), pl.cdiv(D_out, tn))

    # VMEM budget: double-buffered pipelined tiles + persistent xn scratch,
    # 1.5x + 4 MiB headroom, capped at 56 MiB so the budget is also valid on
    # v7x (64 MiB/TC) with room left for compiler-internal scratch.
    x_bytes = jnp.dtype(x.dtype).itemsize
    w_bytes = jnp.dtype(mm_dtype).itemsize
    need = (2 * (tm * D * x_bytes            # x row tile
                 + D * tn * w_bytes          # W column slab
                 + tn * 4                    # bias slab (f32)
                 + 2 * D * 4                 # gamma + beta
                 + tm * tn * x_bytes)        # output tile
            + tm * D * w_bytes)              # xn scratch (not double-buffered)
    vmem_limit = int(min(need + need // 2 + (4 << 20), 56 << 20))

    out2 = pl.pallas_call(
        _prenorm_linear_kernel,
        out_shape=jax.ShapeDtypeStruct((M, D_out), x.dtype),
        grid_spec=pltpu.PrefetchScalarGridSpec(
            num_scalar_prefetch=0,
            grid=grid,
            in_specs=[
                # x row tile: block index constant across j -> re-DMA skipped.
                pl.BlockSpec((tm, D), lambda i, j: (i, 0)),
                pl.BlockSpec((1, D), lambda i, j: (0, 0)),      # gamma
                pl.BlockSpec((1, D), lambda i, j: (0, 0)),      # beta
                pl.BlockSpec((D, tn), lambda i, j: (0, j)),     # W column slab
                pl.BlockSpec((1, tn), lambda i, j: (0, j)),     # bias slab
            ],
            out_specs=pl.BlockSpec((tm, tn), lambda i, j: (i, j)),
            scratch_shapes=[pltpu.VMEM((tm, D), mm_dtype)],     # cached xn
        ),
        compiler_params=pltpu.CompilerParams(
            dimension_semantics=("parallel", "arbitrary"),
            vmem_limit_bytes=vmem_limit,
        ),
    )(x2, gamma2, beta2, w_mm, b2)
    return out2.reshape(B, N, D_out)


def _reference(x, gamma, beta, w, b):
    xf = x.astype(jnp.float32)
    mean = jnp.mean(xf, axis=-1, keepdims=True)
    var = jnp.mean((xf - mean) ** 2, axis=-1, keepdims=True)
    y = (xf - mean) * lax.rsqrt(var + LN_EPS) * gamma.astype(jnp.float32) \
        + beta.astype(jnp.float32)
    return y @ w.astype(jnp.float32) + b.astype(jnp.float32)


# TODO(synk): PreNorm wraps an arbitrary `fn`; only the Linear-first-op case is
# fused here (for a general wrapped fn, the LN output would be handed back to
# the caller instead of being consumed by the in-kernel matmul).

if __name__ == "__main__":
    key = jax.random.PRNGKey(0)
    kx, kg, kb, kw, kbias, kx2 = jax.random.split(key, 6)

    # --- Test 1: f32 path, default tiles, tight tolerance --------------------
    B, N, D, D_out = 2, 8, 256, 256
    x = jax.random.normal(kx, (B, N, D), dtype=jnp.float32)
    gamma = jnp.ones((D,), jnp.float32) + 0.1 * jax.random.normal(kg, (D,), jnp.float32)
    beta = 0.1 * jax.random.normal(kb, (D,), jnp.float32)
    w = jax.random.normal(kw, (D, D_out), jnp.float32) / jnp.sqrt(D)
    b = 0.01 * jax.random.normal(kbias, (D_out,), jnp.float32)

    out = jax.block_until_ready(prenorm_linear(x, gamma, beta, w, b))
    ref = _reference(x, gamma, beta, w, b)
    assert out.shape == (B, N, D_out)
    assert jnp.allclose(out.astype(jnp.float32), ref, atol=1e-4, rtol=1e-4)

    # --- Test 2: bf16 activations, multi row tile, D_out > tile_n ------------
    # (exercises the xn cache being re-used across the j axis)
    B2, N2, D2, D2_out = 2, 72, 256, 512
    x2 = jax.random.normal(kx2, (B2, N2, D2), dtype=jnp.float32).astype(jnp.bfloat16)
    gamma2 = jnp.ones((D2,), jnp.float32)
    beta2 = 0.05 * jax.random.normal(kb, (D2,), jnp.float32)
    w2 = jax.random.normal(kw, (D2, D2_out), jnp.float32) / jnp.sqrt(D2)
    b2 = 0.01 * jax.random.normal(kbias, (D2_out,), jnp.float32)

    out2 = jax.block_until_ready(
        prenorm_linear(x2, gamma2, beta2, w2, b2, tile_m=64, tile_n=256))
    ref2 = _reference(x2, gamma2, beta2, w2, b2)
    assert out2.shape == (B2, N2, D2_out)
    # bf16 MXU operands + bf16 output => loose tolerance.
    assert jnp.allclose(out2.astype(jnp.float32), ref2, atol=1e-1, rtol=1e-1)

    print("KERNEL_OK")
</pallas_src>

<mosaic_0001>
module attributes {stable_mosaic.version = 11 : i64} {
  func.func @_prenorm_linear_kernel(%arg0: i32, %arg1: i32, %arg2: memref<8x256xf32, #tpu.memory_space<vmem>>, %arg3: memref<1x256xf32, #tpu.memory_space<vmem>>, %arg4: memref<1x256xf32, #tpu.memory_space<vmem>>, %arg5: memref<256x256xf32, #tpu.memory_space<vmem>>, %arg6: memref<1x256xf32, #tpu.memory_space<vmem>>, %arg7: memref<8x256xf32, #tpu.memory_space<vmem>>, %arg8: memref<8x256xf32, #tpu.memory_space<vmem>>) attributes {dimension_semantics = [#tpu.dimension_semantics<parallel>, #tpu.dimension_semantics<arbitrary>], iteration_bounds = array<i64: 2, 1>, scalar_prefetch = 0 : i64, scratch_operands = 1 : i64, tpu.core_type = #tpu.core_type<tc>, window_params = [{transform_indices = @transform_0, window_bounds = array<i64: 8, 256>}, {pipeline_mode = #tpu.pipeline_mode<synchronous>, transform_indices = @transform_1, window_bounds = array<i64: 1, 256>}, {pipeline_mode = #tpu.pipeline_mode<synchronous>, transform_indices = @transform_2, window_bounds = array<i64: 1, 256>}, {transform_indices = @transform_3, window_bounds = array<i64: 256, 256>}, {transform_indices = @transform_4, window_bounds = array<i64: 1, 256>}, {transform_indices = @transform_5, window_bounds = array<i64: 8, 256>}]} {
    %c0_i32 = arith.constant 0 : i32
    %0 = arith.cmpi eq, %arg1, %c0_i32 : i32
    %1 = arith.extui %0 : i1 to i32
    %c0_i32_0 = arith.constant 0 : i32
    %2 = arith.cmpi ne, %1, %c0_i32_0 : i32
    scf.if %2 {
      %c0_8 = arith.constant 0 : index
      %c0_9 = arith.constant 0 : index
      %10 = vector.load %arg2[%c0_8, %c0_9] : memref<8x256xf32, #tpu.memory_space<vmem>>, vector<8x256xf32>
      %cst_10 = arith.constant dense<0.000000e+00> : vector<8xf32>
      %11 = vector.multi_reduction <add>, %10, %cst_10 [1] : vector<8x256xf32> to vector<8xf32>
      %12 = vector.shape_cast %11 : vector<8xf32> to vector<8x1xf32>
      %cst_11 = arith.constant 2.560000e+02 : f32
      %13 = vector.broadcast %cst_11 : f32 to vector<8x1xf32>
      %14 = arith.divf %12, %13 : vector<8x1xf32>
      %15 = vector.broadcast %14 : vector<8x1xf32> to vector<8x256xf32>
      %16 = arith.subf %10, %15 : vector<8x256xf32>
      %17 = arith.mulf %16, %16 : vector<8x256xf32>
      %cst_12 = arith.constant dense<0.000000e+00> : vector<8xf32>
      %18 = vector.multi_reduction <add>, %17, %cst_12 [1] : vector<8x256xf32> to vector<8xf32>
      %19 = vector.shape_cast %18 : vector<8xf32> to vector<8x1xf32>
      %cst_13 = arith.constant 2.560000e+02 : f32
      %20 = vector.broadcast %cst_13 : f32 to vector<8x1xf32>
      %21 = arith.divf %19, %20 : vector<8x1xf32>
      %cst_14 = arith.constant 9.99999974E-6 : f32
      %22 = vector.broadcast %cst_14 : f32 to vector<8x1xf32>
      %23 = arith.addf %21, %22 : vector<8x1xf32>
      %24 = math.rsqrt %23 : vector<8x1xf32>
      %25 = vector.broadcast %24 : vector<8x1xf32> to vector<8x256xf32>
      %26 = arith.mulf %16, %25 : vector<8x256xf32>
      %c0_15 = arith.constant 0 : index
      %c0_16 = arith.constant 0 : index
      %27 = vector.load %arg3[%c0_15, %c0_16] : memref<1x256xf32, #tpu.memory_space<vmem>>, vector<1x256xf32>
      %28 = vector.broadcast %27 : vector<1x256xf32> to vector<8x256xf32>
      %29 = arith.mulf %26, %28 : vector<8x256xf32>
      %c0_17 = arith.constant 0 : index
      %c0_18 = arith.constant 0 : index
      %30 = vector.load %arg4[%c0_17, %c0_18] : memref<1x256xf32, #tpu.memory_space<vmem>>, vector<1x256xf32>
      %31 = vector.broadcast %30 : vector<1x256xf32> to vector<8x256xf32>
      %32 = arith.addf %29, %31 : vector<8x256xf32>
      %c0_19 = arith.constant 0 : index
      %c0_20 = arith.constant 0 : index
      %33 = vector.load %arg8[%c0_19, %c0_20] : memref<8x256xf32, #tpu.memory_space<vmem>>, vector<8x256xf32>
      tpu.vector_store %arg8[%c0_19, %c0_20], %32 {strides = array<i32>} : memref<8x256xf32, #tpu.memory_space<vmem>>, vector<8x256xf32>,
    } else {
    }
    %c0 = arith.constant 0 : index
    %c0_1 = arith.constant 0 : index
    %3 = vector.load %arg8[%c0, %c0_1] : memref<8x256xf32, #tpu.memory_space<vmem>>, vector<8x256xf32>
    %c0_2 = arith.constant 0 : index
    %c0_3 = arith.constant 0 : index
    %4 = vector.load %arg5[%c0_2, %c0_3] : memref<256x256xf32, #tpu.memory_space<vmem>>, vector<256x256xf32>
    %cst = arith.constant dense<0.000000e+00> : vector<8x256xf32>
    %5 = tpu.matmul %3, %4, %cst {dimension_numbers = #tpu.dot_dimension_numbers<[1], [0], [0], [1], [0, 0, 1, 1], [], []>} : vector<8x256xf32>, vector<256x256xf32>, vector<8x256xf32> -> vector<8x256xf32>
    %c0_4 = arith.constant 0 : index
    %c0_5 = arith.constant 0 : index
    %6 = vector.load %arg6[%c0_4, %c0_5] : memref<1x256xf32, #tpu.memory_space<vmem>>, vector<1x256xf32>
    %7 = vector.broadcast %6 : vector<1x256xf32> to vector<8x256xf32>
    %8 = arith.addf %5, %7 : vector<8x256xf32>
    %c0_6 = arith.constant 0 : index
    %c0_7 = arith.constant 0 : index
    %9 = vector.load %arg7[%c0_6, %c0_7] : memref<8x256xf32, #tpu.memory_space<vmem>>, vector<8x256xf32>
    tpu.vector_store %arg7[%c0_6, %c0_7], %8 {strides = array<i32>} : memref<8x256xf32, #tpu.memory_space<vmem>>, vector<8x256xf32>,
    return
  }
  func.func @transform_0(%arg0: i32, %arg1: i32) -> (i32, i32) {
    %c0_i32 = arith.constant 0 : i32
    %c0_i32_0 = arith.constant 0 : i32
    return %arg0, %c0_i32 : i32, i32
  }
  func.func @transform_1(%arg0: i32, %arg1: i32) -> (i32, i32) {
    %c0_i32 = arith.constant 0 : i32
    %c0_i32_0 = arith.constant 0 : i32
    %c0_i32_1 = arith.constant 0 : i32
    return %c0_i32, %c0_i32_0 : i32, i32
  }
  func.func @transform_2(%arg0: i32, %arg1: i32) -> (i32, i32) {
    %c0_i32 = arith.constant 0 : i32
    %c0_i32_0 = arith.constant 0 : i32
    %c0_i32_1 = arith.constant 0 : i32
    return %c0_i32, %c0_i32_0 : i32, i32
  }
  func.func @transform_3(%arg0: i32, %arg1: i32) -> (i32, i32) {
    %c0_i32 = arith.constant 0 : i32
    %c0_i32_0 = arith.constant 0 : i32
    return %c0_i32, %arg1 : i32, i32
  }
  func.func @transform_4(%arg0: i32, %arg1: i32) -> (i32, i32) {
    %c0_i32 = arith.constant 0 : i32
    %c0_i32_0 = arith.constant 0 : i32
    return %c0_i32, %arg1 : i32, i32
  }
  func.func @transform_5(%arg0: i32, %arg1: i32) -> (i32, i32) {
    %c0_i32 = arith.constant 0 : i32
    return %arg0, %arg1 : i32, i32
  }
}

</mosaic_0001>

<llo_original>
// kernel: prenorm_linear.1
$region0: #{prenorm_linear.1}
  #allocation0 [shape = 'u32[]', space=smem, size = 0x4, offset = 0x4, fixed_abs, tag = 'smem constant byte address 0x4 - core index']
  #allocation1 [shape = 'u32[72,128]{1,0:T(1,128)}', space=vmem, size = 0x9000, scoped, tag = 'internal scratch']
  #allocation2 [shape = 'f32[8,256]{1,0:T(8,128)}', space=vmem, size = 0x2000, scoped, tag = 'scratch operand']
  %s0 = inlined_call_operand.hbm [shape: f32[16,256], index: 0, kind: input, shape index: {}]
  %s1 = inlined_call_operand.vmem [shape: f32[1,256], index: 1, kind: input, shape index: {}]
  %s2 = inlined_call_operand.vmem [shape: f32[1,256], index: 2, kind: input, shape index: {}]
  %s3 = inlined_call_operand.hbm [shape: f32[256,256], index: 3, kind: input, shape index: {}]
  %s4 = inlined_call_operand.vmem [shape: f32[1,256], index: 4, kind: input, shape index: {}]
  %s5 = inlined_call_operand.hbm [shape: f32[16,256], index: 5, kind: output, shape index: {}]
  %s6 = sld [smem:[#allocation0]]
  $region65: #{prenorm_linear.1} parent=0
    _
  %s8 = ssub.s32 1, %s6
  %s9 = scalar_select 0, %s8, %s6
  $region1: #{prenorm_linear.1} parent=0
    #allocation3 [shape = 'u8[16384]{0}', space=vmem, size = 0x4000, scoped, tag = 'input window, operand 0']
    #allocation4 [shape = 's32[2]{0}', space=sflag, size = 0x8, scoped, tag = 'scoped memory for prenorm_linear.1']
    #allocation5 [shape = 's32[2]{0}', space=sflag, size = 0x8, scoped, tag = 'scoped memory for prenorm_linear.1']
    #allocation6 [shape = 'u8[262144]{0}', space=vmem, size = 0x40000, scoped, tag = 'input window, operand 3, single buffered']
    #allocation7 [shape = 's32[1]{0}', space=sflag, size = 0x4, scoped, tag = 'scoped memory for prenorm_linear.1']
    #allocation8 [shape = 'u8[16384]{0}', space=vmem, size = 0x4000, scoped, tag = 'output window, operand 0']
    %10 = vsyncpa [#allocation4], 0
    %s11 = scalar_lea.sflag [#allocation4], 1
    %12 = vsyncpa %s11, 0
    %13 = vsyncpa [#allocation7], 0
    %14 = vsyncpa [#allocation5], 0
    %s15 = scalar_lea.sflag [#allocation5], 1
    %16 = vsyncpa %s15, 0
    loop: start=0, step=1, limit=4
    $region2: #{prenorm_linear.1} parent=1 // loop_pre_header
      _
    $region3: #{prenorm_linear.1} parent=1 // loop_header
      %s18 = sphi 0, %s22
      %p19 = scmp.ge.s32.totalorder %s18, 4
      %s25 = sphi 0, %s37
      %s26 = sphi 0, %s33
      %s27 = sphi 0, %s25
      %s28 = sphi 0, %s26
      %s29 = sphi 0, %s27
      %s30 = sphi 0, %s28
      %s40 = sphi 0, %s42
      %s43 = sphi 0, %s40
      %s44 = sphi 0, %s43
      %s60 = sphi 0, %s44
      %s64 = sphi 0, %s64
      %s66 = sphi 0, %s64
      %s67 = sphi 0, %s66
      %s81 = sphi 0, %s67
      %s85 = sphi 0, %s85
      %s87 = sphi 0, %s85
      %s88 = sphi 0, %s87
      %s102 = sphi 0, %s88
      %s108 = sphi 0, %s110
      %s111 = sphi 0, %s108
      %s112 = sphi 0, %s111
      %s128 = sphi 0, %s112
      %s134 = sphi 0, %s136
      %s137 = sphi 0, %s134
      %s138 = sphi 0, %s137
      %s154 = sphi 0, %s138
      %s162 = sphi 0, %s164
      %s165 = sphi 0, %s162
      %s166 = sphi 0, %s165
      %s182 = sphi 0, %s166
    $region4: #{prenorm_linear.1} parent=1 // loop_header_branch
      %21 = sbr.rel (%p19) target = $region8
    $region5: #{prenorm_linear.1} parent=1 // loop_body
      %s23 = ssub.s32 %s18, 1
      %s24 = ssub.s32 %s18, 2
      %s31 = sadd.s32 1, %s26
      %p32 = scmp.ge.s32.totalorder %s31, 1
      %s33 = scalar_select %p32, 0, %s31
      %s34 = sadd.s32 1, %s25
      %s35 = scalar_select %p32, %s34, %s25
      %p36 = scmp.ge.s32.totalorder %s35, 2
      %s37 = scalar_select %p36, 0, %s35
      %s38 = ssub.s32 %s25, %s37
      %p39 = scmp.eq.s32.totalorder %s38, 0
      %s41 = sadd.s32 %s40, 1
      %s42 = scalar_select %p39, %s40, %s41
      %p45 = pneg %p39
      %p46 = scmp.eq.s32.totalorder %s18, 1
      %p47 = por %p45, %p46
      %p48 = scmp.ne.s32.totalorder %s40, %s43
      %p49 = scmp.eq.s32.totalorder %s18, 0
      %p50 = por %p48, %p49
      %p51 = scmp.ne.s32.totalorder %s40, %s43
      %p52 = scmp.eq.s32.totalorder %s23, 1
      %p53 = por %p51, %p52
      %p54 = scmp.ne.s32.totalorder %s43, %s44
      %p55 = scmp.eq.s32.totalorder %s23, 0
      %p56 = por %p54, %p55
      %p57 = scmp.ne.s32.totalorder %s43, %s44
      %p58 = scmp.eq.s32.totalorder %s24, 1
      %p59 = por %p57, %p58
      %p61 = scmp.ne.s32.totalorder %s44, %s60
      %p62 = scmp.eq.s32.totalorder %s24, 0
      %p63 = por %p61, %p62
      %s65 = sadd.s32 %s64, 1
      %p68 = scmp.eq.s32.totalorder %s18, 1
      %p69 = scmp.ne.s32.totalorder %s64, %s66
      %p70 = scmp.eq.s32.totalorder %s18, 0
      %p71 = por %p69, %p70
      %p72 = scmp.ne.s32.totalorder %s64, %s66
      %p73 = scmp.eq.s32.totalorder %s23, 1
      %p74 = por %p72, %p73
      %p75 = scmp.ne.s32.totalorder %s66, %s67
      %p76 = scmp.eq.s32.totalorder %s23, 0
      %p77 = por %p75, %p76
      %p78 = scmp.ne.s32.totalorder %s66, %s67
      %p79 = scmp.eq.s32.totalorder %s24, 1
      %p80 = por %p78, %p79
      %p82 = scmp.ne.s32.totalorder %s67, %s81
      %p83 = scmp.eq.s32.totalorder %s24, 0
      %p84 = por %p82, %p83
      %s86 = sadd.s32 %s85, 1
      %p89 = scmp.eq.s32.totalorder %s18, 1
      %p90 = scmp.ne.s32.totalorder %s85, %s87
      %p91 = scmp.eq.s32.totalorder %s18, 0
      %p92 = por %p90, %p91
      %p93 = scmp.ne.s32.totalorder %s85, %s87
      %p94 = scmp.eq.s32.totalorder %s23, 1
      %p95 = por %p93, %p94
      %p96 = scmp.ne.s32.totalorder %s87, %s88
      %p97 = scmp.eq.s32.totalorder %s23, 0
      %p98 = por %p96, %p97
      %p99 = scmp.ne.s32.totalorder %s87, %s88
      %p100 = scmp.eq.s32.totalorder %s24, 1
      %p101 = por %p99, %p100
      %p103 = scmp.ne.s32.totalorder %s88, %s102
      %p104 = scmp.eq.s32.totalorder %s24, 0
      %p105 = por %p103, %p104
      %s106 = ssub.s32 %s26, %s33
      %p107 = scmp.eq.s32.totalorder %s106, 0
      %s109 = sadd.s32 %s108, 1
      %s110 = scalar_select %p107, %s108, %s109
      %p113 = pneg %p107
      %p114 = scmp.eq.s32.totalorder %s18, 1
      %p115 = por %p113, %p114
      %p116 = scmp.ne.s32.totalorder %s108, %s111
      %p117 = scmp.eq.s32.totalorder %s18, 0
      %p118 = por %p116, %p117
      %p119 = scmp.ne.s32.totalorder %s108, %s111
      %p120 = scmp.eq.s32.totalorder %s23, 1
      %p121 = por %p119, %p120
      %p122 = scmp.ne.s32.totalorder %s111, %s112
      %p123 = scmp.eq.s32.totalorder %s23, 0
      %p124 = por %p122, %p123
      %p125 = scmp.ne.s32.totalorder %s111, %s112
      %p126 = scmp.eq.s32.totalorder %s24, 1
      %p127 = por %p125, %p126
      %p129 = scmp.ne.s32.totalorder %s112, %s128
      %p130 = scmp.eq.s32.totalorder %s24, 0
      %p131 = por %p129, %p130
      %s132 = ssub.s32 %s26, %s33
      %p133 = scmp.eq.s32.totalorder %s132, 0
      %s135 = sadd.s32 %s134, 1
      %s136 = scalar_select %p133, %s134, %s135
      %p139 = pneg %p133
      %p140 = scmp.eq.s32.totalorder %s18, 1
      %p141 = por %p139, %p140
      %p142 = scmp.ne.s32.totalorder %s134, %s137
      %p143 = scmp.eq.s32.totalorder %s18, 0
      %p144 = por %p142, %p143
      %p145 = scmp.ne.s32.totalorder %s134, %s137
      %p146 = scmp.eq.s32.totalorder %s23, 1
      %p147 = por %p145, %p146
      %p148 = scmp.ne.s32.totalorder %s137, %s138
      %p149 = scmp.eq.s32.totalorder %s23, 0
      %p150 = por %p148, %p149
      %p151 = scmp.ne.s32.totalorder %s137, %s138
      %p152 = scmp.eq.s32.totalorder %s24, 1
      %p153 = por %p151, %p152
      %p155 = scmp.ne.s32.totalorder %s138, %s154
      %p156 = scmp.eq.s32.totalorder %s24, 0
      %p157 = por %p155, %p156
      %s158 = ssub.s32 %s25, %s37
      %s159 = ssub.s32 %s26, %s33
      %s160 = sor.u32 %s158, %s159
      %p161 = scmp.eq.s32.totalorder %s160, 0
      %s163 = sadd.s32 %s162, 1
      %s164 = scalar_select %p161, %s162, %s163
      %p167 = pneg %p161
      %p168 = scmp.eq.s32.totalorder %s18, 1
      %p169 = por %p167, %p168
      %p170 = scmp.ne.s32.totalorder %s162, %s165
      %p171 = scmp.eq.s32.totalorder %s18, 0
      %p172 = por %p170, %p171
      %p173 = scmp.ne.s32.totalorder %s162, %s165
      %p174 = scmp.eq.s32.totalorder %s23, 1
      %p175 = por %p173, %p174
      %p176 = scmp.ne.s32.totalorder %s165, %s166
      %p177 = scmp.eq.s32.totalorder %s23, 0
      %p178 = por %p176, %p177
      %p179 = scmp.ne.s32.totalorder %s165, %s166
      %p180 = scmp.eq.s32.totalorder %s24, 1
      %p181 = por %p179, %p180
      %p183 = scmp.ne.s32.totalorder %s166, %s182
      %p184 = scmp.eq.s32.totalorder %s24, 0
      %p185 = por %p183, %p184
      %p186 = scmp.le.s32.totalorder 1, %s18
      %p187 = scmp.lt.s32.totalorder %s18, 3
      %p188 = pnand %p186, %p187
      %p189 = pneg %p188
      // Predicated region
      $region9: #{prenorm_linear.1} parent=5 // pred_check
        _
      $region10: #{prenorm_linear.1} parent=5 // pred_check_branch
        %191 = sbr.rel (%p188) target = $region12
      $region11: #{prenorm_linear.1} parent=5 // pred_region
        %s192 = ssub.s32 %s18, 1
        // Predicated region
        $region13: #{prenorm_linear.1} parent=11 // pred_check
          %p193 = pneg %p77
        $region14: #{prenorm_linear.1} parent=11 // pred_check_branch
          %195 = sbr.rel (%p193) target = $region16
        $region15: #{prenorm_linear.1} parent=11 // pred_region
          _
        $region16: #{prenorm_linear.1} parent=11 // pred_fallthru
          _
        // Predicated region
        $region17: #{prenorm_linear.1} parent=11 // pred_check
          %p196 = pneg %p98
        $region18: #{prenorm_linear.1} parent=11 // pred_check_branch
          %198 = sbr.rel (%p196) target = $region20
        $region19: #{prenorm_linear.1} parent=11 // pred_region
          _
        $region20: #{prenorm_linear.1} parent=11 // pred_fallthru
          _
        // Predicated region
        $region21: #{prenorm_linear.1} parent=11 // pred_check
          %p199 = pneg %p124
        $region22: #{prenorm_linear.1} parent=11 // pred_check_branch
          %201 = sbr.rel (%p199) target = $region24
        $region23: #{prenorm_linear.1} parent=11 // pred_region
          %s202 = smul.u32 2, %s28
          %204 = vsyncadd [#allocation7], 0
          %s205 = smul.addr %s202, 8
          %s206 = scalar_lea.hbm %s3, %s205
          %s207 = sshll.u32 %s206, 4
          %s208 = int_to_ptr.hbm [resolvable:$true] %s207
          %s209 = sshll.u32 [#allocation6], 4
          %s210 = int_to_ptr.vmem [resolvable:$true] %s209
          %215 = dma.hbm_to_vmem [thread:$0]  %s208, 8192, %s210, [#allocation7], 256, 256, 16
        $region24: #{prenorm_linear.1} parent=11 // pred_fallthru
          _
        // Predicated region
        $region25: #{prenorm_linear.1} parent=11 // pred_check
          %p216 = pneg %p150
        $region26: #{prenorm_linear.1} parent=11 // pred_check_branch
          %218 = sbr.rel (%p216) target = $region28
        $region27: #{prenorm_linear.1} parent=11 // pred_region
          %s219 = smul.u32 2, %s28
          %p220 = scmp.lt.s32.totalorder %s219, 1
          %s221 = scalar_select %p220, %s219, 1
          %s222 = scalar_lea.vmem %s4, %s221
          %s223 = smul.u32 2, %s28
        $region28: #{prenorm_linear.1} parent=11 // pred_fallthru
          _
      $region12: #{prenorm_linear.1} parent=5 // pred_fallthru
        _
      %p224 = scmp.lt.s32.totalorder %s18, 2
      // Predicated region
      $region29: #{prenorm_linear.1} parent=5 // pred_check
        %p225 = pneg %p224
      $region30: #{prenorm_linear.1} parent=5 // pred_check_branch
        %227 = sbr.rel (%p225) target = $region32
      $region31: #{prenorm_linear.1} parent=5 // pred_region
        // Predicated region
        $region33: #{prenorm_linear.1} parent=31 // pred_check
          %p228 = pneg %p50
        $region34: #{prenorm_linear.1} parent=31 // pred_check_branch
          %230 = sbr.rel (%p228) target = $region36
        $region35: #{prenorm_linear.1} parent=31 // pred_region
          %s231 = sand.u32 %s40, 1
          %s232 = scalar_lea.sflag [#allocation4], %s231
          %s233 = sand.u32 %s40, 1
          %s234 = smul.addr %s233, 16
          %s235 = scalar_lea.vmem [#allocation3], %s234
          %237 = vsyncadd %s232, 0
          %s238 = smul.addr %s25, 2
          %s239 = smul.addr %s238, 8
          %s240 = scalar_lea.hbm %s0, %s239
          %s242 = sshll.u32 %s240, 4
          %s243 = int_to_ptr.hbm [resolvable:$true] %s242
          %s244 = sshll.u32 %s235, 4
          %s245 = int_to_ptr.vmem [resolvable:$true] %s244
          %247 = dma.hbm_to_vmem [thread:$0]  %s243, 256, %s245, %s232
        $region36: #{prenorm_linear.1} parent=31 // pred_fallthru
          _
      $region32: #{prenorm_linear.1} parent=5 // pred_fallthru
        _
      %p248 = scmp.le.s32.totalorder 1, %s18
      %p249 = scmp.lt.s32.totalorder %s18, 3
      %p250 = pnand %p248, %p249
      %p251 = pneg %p250
      // Predicated region
      $region37: #{prenorm_linear.1} parent=5 // pred_check
        _
      $region38: #{prenorm_linear.1} parent=5 // pred_check_branch
        %253 = sbr.rel (%p250) target = $region40
      $region39: #{prenorm_linear.1} parent=5 // pred_region
        %s254 = ssub.s32 %s18, 1
        %s255 = sand.u32 %s43, 1
        %s256 = scalar_lea.sflag [#allocation4], %s255
        %s257 = sand.u32 %s43, 1
        %s258 = smul.addr %s257, 16
        %s259 = scalar_lea.vmem [#allocation3], %s258
        // Predicated region
        $region41: #{prenorm_linear.1} parent=39 // pred_check
          %p260 = pneg %p56
        $region42: #{prenorm_linear.1} parent=39 // pred_check_branch
          %262 = sbr.rel (%p260) target = $region44
        $region43: #{prenorm_linear.1} parent=39 // pred_region
          %264 = dma.done %s256, 256
        $region44: #{prenorm_linear.1} parent=39 // pred_fallthru
          _
        // Predicated region
        $region45: #{prenorm_linear.1} parent=39 // pred_check
          %p265 = pneg %p124
        $region46: #{prenorm_linear.1} parent=39 // pred_check_branch
          %267 = sbr.rel (%p265) target = $region48
        $region47: #{prenorm_linear.1} parent=39 // pred_region
          %269 = dma.done [#allocation7], 8192
        $region48: #{prenorm_linear.1} parent=39 // pred_fallthru
          _
        %s270 = sand.u32 %s43, 1
        %s271 = scalar_lea.sflag [#allocation4], %s270
        %s272 = sand.u32 %s43, 1
        %s273 = smul.addr %s272, 16
        %s274 = scalar_lea.vmem [#allocation3], %s273
        %p275 = pneg %p56
        %p276 = pneg %p53
        %p277 = pneg %p77
        %p278 = pneg %p74
        %p279 = pneg %p98
        %p280 = pneg %p95
        %p281 = pneg %p124
        %p282 = pneg %p121
        %s283 = smul.u32 2, %s28
        %p284 = scmp.lt.s32.totalorder %s283, 1
        %s285 = scalar_select %p284, %s283, 1
        %s286 = scalar_lea.vmem %s4, %s285
        %p287 = pneg %p150
        %p288 = pneg %p147
        %p289 = pneg %p178
        %p290 = pneg %p175
        %s291 = sand.u32 %s165, 1
        %s292 = scalar_lea.sflag [#allocation5], %s291
        %s293 = sand.u32 %s165, 1
        %s294 = smul.addr %s293, 16
        %s295 = scalar_lea.vmem [#allocation8], %s294
        %s296 = smul.u32 2, %s28
        %s297 = smul.u32 2, %s28
        %p298 = scmp.lt.s32.totalorder %s297, 1
        %s299 = scalar_select %p298, %s297, 1
        %s300 = scalar_lea.vmem %s4, %s299
        %s301 = smul.u32 2, %s28
        %s302 = smul.u32 2, %s28
        %p303 = scmp.eq.s32.totalorder %s28, 0
        // Predicated region
        $region49: #{prenorm_linear.1} parent=39 // pred_check
          %p304 = pneg %p303
        $region50: #{prenorm_linear.1} parent=39 // pred_check_branch
          %306 = sbr.rel (%p304) target = $region52
        $region51: #{prenorm_linear.1} parent=39 // pred_region
          %v307 = vld [vmem:[%s259] sm:$0xff]
          %v308 = vld [vmem:[%s259 + $0x8] sm:$0xff]
          %v309 = vadd.f32 %v307, %v308
          %310 = vadd.xlane.f32.xlu0 %v309
          %v311 = vpop.xlane.xlu0 %310
          %v312 = vrcp.pop 256.0
          %v313 = vmul.f32 256.0, %v312
          %v314 = vsub.f32 1.0, %v313
          %v315 = vmul.f32 %v312, %v314
          %v316 = vadd.f32 %v312, %v315
          %vm317 = vweird.f32 %v312
          %v318 = vsel %vm317, %v312, %v316
          %v319 = vmul.f32 %v311, %v318
          %v320 = vsub.f32 %v307, %v319
          %v321 = vsub.f32 %v308, %v319
          %v322 = vmul.f32 %v320, %v320
          %v323 = vmul.f32 %v321, %v321
          %v324 = vadd.f32 %v322, %v323
          %325 = vadd.xlane.f32.xlu0 %v324
          %v326 = vpop.xlane.xlu0 %325
          %v327 = vmul.f32 %v326, %v318
          %v328 = vadd.f32 %v327, 1e-05
          %v329 = vrsqrt.pop %v328
          %v330 = vmul.f32 %v329, %v328
          %v331 = vmul.f32 %v330, %v329
          %v332 = vmul.f32 0.5, %v331
          %v333 = vsub.f32 1.5, %v332
          %v334 = vmul.f32 %v329, %v333
          %vm335 = vweird.f32 %v328
          %vm336 = vweird.f32 %v329
          %vm337 = vmor %vm335, %vm336
          %v338 = vsel %vm337, %v329, %v334
          %v339 = vmul.f32 %v320, %v338
          %v340 = vmul.f32 %v321, %v338
          %v341 = vld [vmem:[%s1] sm:$0x3]
          %v343 = vperm.slane %v341, 0
          %v344 = vperm.slane %v341, 1
          %v347 = vmul.f32 %v339, %v343
          %v348 = vmul.f32 %v340, %v344
          %v349 = vld [vmem:[%s2] sm:$0x3]
          %v351 = vperm.slane %v349, 0
          %v352 = vperm.slane %v349, 1
          %v355 = vadd.f32 %v347, %v351
          %v356 = vadd.f32 %v348, %v352
          %357 = vst [vmem:[#allocation2] sm:$0xff] %v355
          %358 = vst [vmem:[#allocation2 + $0x8] sm:$0xff] %v356
        $region52: #{prenorm_linear.1} parent=39 // pred_fallthru
          _
        %v359 = vld [vmem:[#allocation2] sm:$0xff]
        %v360 = vld [vmem:[#allocation2 + $0x8] sm:$0xff]
        %v361 = vld [vmem:[#allocation6] sm:$0xff]
        %v362 = vld [vmem:[#allocation6 + $0x8] sm:$0xff]
        %v363 = vld [vmem:[#allocation6 + $0x10] sm:$0xff]
        %v364 = vld [vmem:[#allocation6 + $0x18] sm:$0xff]
        %v365 = vld [vmem:[#allocation6 + $0x20] sm:$0xff]
        %v366 = vld [vmem:[#allocation6 + $0x28] sm:$0xff]
        %v367 = vld [vmem:[#allocation6 + $0x30] sm:$0xff]
        %v368 = vld [vmem:[#allocation6 + $0x38] sm:$0xff]
        %v369 = vld [vmem:[#allocation6 + $0x40] sm:$0xff]
        %v370 = vld [vmem:[#allocation6 + $0x48] sm:$0xff]
        %v371 = vld [vmem:[#allocation6 + $0x50] sm:$0xff]
        %v372 = vld [vmem:[#allocation6 + $0x58] sm:$0xff]
        %v373 = vld [vmem:[#allocation6 + $0x60] sm:$0xff]
        %v374 = vld [vmem:[#allocation6 + $0x68] sm:$0xff]
        %v375 = vld [vmem:[#allocation6 + $0x70] sm:$0xff]
        %v376 = vld [vmem:[#allocation6 + $0x78] sm:$0xff]
        %v377 = vld [vmem:[#allocation6 + $0x80] sm:$0xff]
        %v378 = vld [vmem:[#allocation6 + $0x88] sm:$0xff]
        %v379 = vld [vmem:[#allocation6 + $0x90] sm:$0xff]
        %v380 = vld [vmem:[#allocation6 + $0x98] sm:$0xff]
        %v381 = vld [vmem:[#allocation6 + $0xa0] sm:$0xff]
        %v382 = vld [vmem:[#allocation6 + $0xa8] sm:$0xff]
        %v383 = vld [vmem:[#allocation6 + $0xb0] sm:$0xff]
        %v384 = vld [vmem:[#allocation6 + $0xb8] sm:$0xff]
        %v385 = vld [vmem:[#allocation6 + $0xc0] sm:$0xff]
        %v386 = vld [vmem:[#allocation6 + $0xc8] sm:$0xff]
        %v387 = vld [vmem:[#allocation6 + $0xd0] sm:$0xff]
        %v388 = vld [vmem:[#allocation6 + $0xd8] sm:$0xff]
        %v389 = vld [vmem:[#allocation6 + $0xe0] sm:$0xff]
        %v390 = vld [vmem:[#allocation6 + $0xe8] sm:$0xff]
        %v391 = vld [vmem:[#allocation6 + $0xf0] sm:$0xff]
        %v392 = vld [vmem:[#allocation6 + $0xf8] sm:$0xff]
        %v393 = vld [vmem:[#allocation6 + $0x100] sm:$0xff]
        %v394 = vld [vmem:[#allocation6 + $0x108] sm:$0xff]
        %v395 = vld [vmem:[#allocation6 + $0x110] sm:$0xff]
        %v396 = vld [vmem:[#allocation6 + $0x118] sm:$0xff]
        %v397 = vld [vmem:[#allocation6 + $0x120] sm:$0xff]
        %v398 = vld [vmem:[#allocation6 + $0x128] sm:$0xff]
        %v399 = vld [vmem:[#allocation6 + $0x130] sm:$0xff]
        %v400 = vld [vmem:[#allocation6 + $0x138] sm:$0xff]
        %v401 = vld [vmem:[#allocation6 + $0x140] sm:$0xff]
        %v402 = vld [vmem:[#allocation6 + $0x148] sm:$0xff]
        %v403 = vld [vmem:[#allocation6 + $0x150] sm:$0xff]
        %v404 = vld [vmem:[#allocation6 + $0x158] sm:$0xff]
        %v405 = vld [vmem:[#allocation6 + $0x160] sm:$0xff]
        %v406 = vld [vmem:[#allocation6 + $0x168] sm:$0xff]
        %v407 = vld [vmem:[#allocation6 + $0x170] sm:$0xff]
        %v408 = vld [vmem:[#allocation6 + $0x178] sm:$0xff]
        %v409 = vld [vmem:[#allocation6 + $0x180] sm:$0xff]
        %v410 = vld [vmem:[#allocation6 + $0x188] sm:$0xff]
        %v411 = vld [vmem:[#allocation6 + $0x190] sm:$0xff]
        %v412 = vld [vmem:[#allocation6 + $0x198] sm:$0xff]
        %v413 = vld [vmem:[#allocation6 + $0x1a0] sm:$0xff]
        %v414 = vld [vmem:[#allocation6 + $0x1a8] sm:$0xff]
        %v415 = vld [vmem:[#allocation6 + $0x1b0] sm:$0xff]
        %v416 = vld [vmem:[#allocation6 + $0x1b8] sm:$0xff]
        %v417 = vld [vmem:[#allocation6 + $0x1c0] sm:$0xff]
        %v418 = vld [vmem:[#allocation6 + $0x1c8] sm:$0xff]
        %v419 = vld [vmem:[#allocation6 + $0x1d0] sm:$0xff]
        %v420 = vld [vmem:[#allocation6 + $0x1d8] sm:$0xff]
        %v421 = vld [vmem:[#allocation6 + $0x1e0] sm:$0xff]
        %v422 = vld [vmem:[#allocation6 + $0x1e8] sm:$0xff]
        %v423 = vld [vmem:[#allocation6 + $0x1f0] sm:$0xff]
        %v424 = vld [vmem:[#allocation6 + $0x1f8] sm:$0xff]
        %v425 = vld [vmem:[%s300] sm:$0x3]
        %v427 = vperm.slane %v425, 0
        %v428 = vperm.slane %v425, 1
        %431 = vmatpush.msra.mxu0 %v391
        %432 = vmatpush.msra.mxu0 %v389
        %433 = vmatpush.msra.mxu0 %v387
        %434 = vmatpush.msra.mxu0 %v385
        %435 = vmatpush.msra.mxu0 %v383
        %436 = vmatpush.msra.mxu0 %v381
        %437 = vmatpush.msra.mxu0 %v379
        %438 = vmatpush.msra.mxu0 %v377
        %439 = vmatpush.msra.mxu0 %v375
        %440 = vmatpush.msra.mxu0 %v373
        %441 = vmatpush.msra.mxu0 %v371
        %442 = vmatpush.msra.mxu0 %v369
        %443 = vmatpush.msra.mxu0 %v367
        %444 = vmatpush.msra.mxu0 %v365
        %445 = vmatpush.msra.mxu0 %v363
        %446 = vmatpush.msra.mxu0 %v361
        %447 = vmatmul.f32.gmra.mxu0 %v359
        %v448 = vpop.f32.mrf.mxu0
        %v449 = vadd.f32 %v427, %v448
        %450 = vdwg.mxu0
        %451 = vmatpush.msra.mxu0 %v423
        %452 = vmatpush.msra.mxu0 %v421
        %453 = vmatpush.msra.mxu0 %v419
        %454 = vmatpush.msra.mxu0 %v417
        %455 = vmatpush.msra.mxu0 %v415
        %456 = vmatpush.msra.mxu0 %v413
        %457 = vmatpush.msra.mxu0 %v411
        %458 = vmatpush.msra.mxu0 %v409
        %459 = vmatpush.msra.mxu0 %v407
        %460 = vmatpush.msra.mxu0 %v405
        %461 = vmatpush.msra.mxu0 %v403
        %462 = vmatpush.msra.mxu0 %v401
        %463 = vmatpush.msra.mxu0 %v399
        %464 = vmatpush.msra.mxu0 %v397
        %465 = vmatpush.msra.mxu0 %v395
        %466 = vmatpush.msra.mxu0 %v393
        %467 = vmatmul.f32.gmra.mxu0 %v360
        %v468 = vpop.f32.mrf.mxu0
        %v469 = vadd.f32 %v449, %v468
        %470 = vdwg.mxu0
        %471 = vmatpush.msra.mxu0 %v392
        %472 = vmatpush.msra.mxu0 %v390
        %473 = vmatpush.msra.mxu0 %v388
        %474 = vmatpush.msra.mxu0 %v386
        %475 = vmatpush.msra.mxu0 %v384
        %476 = vmatpush.msra.mxu0 %v382
        %477 = vmatpush.msra.mxu0 %v380
        %478 = vmatpush.msra.mxu0 %v378
        %479 = vmatpush.msra.mxu0 %v376
        %480 = vmatpush.msra.mxu0 %v374
        %481 = vmatpush.msra.mxu0 %v372
        %482 = vmatpush.msra.mxu0 %v370
        %483 = vmatpush.msra.mxu0 %v368
        %484 = vmatpush.msra.mxu0 %v366
        %485 = vmatpush.msra.mxu0 %v364
        %486 = vmatpush.msra.mxu0 %v362
        %487 = vmatmul.f32.gmra.mxu0 %v359
        %v488 = vpop.f32.mrf.mxu0
        %v489 = vadd.f32 %v428, %v488
        %490 = vdwg.mxu0
        %491 = vmatpush.msra.mxu0 %v424
        %492 = vmatpush.msra.mxu0 %v422
        %493 = vmatpush.msra.mxu0 %v420
        %494 = vmatpush.msra.mxu0 %v418
        %495 = vmatpush.msra.mxu0 %v416
        %496 = vmatpush.msra.mxu0 %v414
        %497 = vmatpush.msra.mxu0 %v412
        %498 = vmatpush.msra.mxu0 %v410
        %499 = vmatpush.msra.mxu0 %v408
        %500 = vmatpush.msra.mxu0 %v406
        %501 = vmatpush.msra.mxu0 %v404
        %502 = vmatpush.msra.mxu0 %v402
        %503 = vmatpush.msra.mxu0 %v400
        %504 = vmatpush.msra.mxu0 %v398
        %505 = vmatpush.msra.mxu0 %v396
        %506 = vmatpush.msra.mxu0 %v394
        %507 = vmatmul.f32.gmra.mxu0 %v360
        %v508 = vpop.f32.mrf.mxu0
        %v509 = vadd.f32 %v489, %v508
        %510 = vdwg.mxu0
        %511 = vst [vmem:[%s295] sm:$0xff] %v469
        %512 = vst [vmem:[%s295 + $0x8] sm:$0xff] %v509
        %s513 = sand.u32 %s165, 1
        %s514 = scalar_lea.sflag [#allocation5], %s513
        %s515 = sand.u32 %s165, 1
        %s516 = smul.addr %s515, 16
        %s517 = scalar_lea.vmem [#allocation8], %s516
        // Predicated region
        $region53: #{prenorm_linear.1} parent=39 // pred_check
          %p518 = pneg %p175
        $region54: #{prenorm_linear.1} parent=39 // pred_check_branch
          %520 = sbr.rel (%p518) target = $region56
        $region55: #{prenorm_linear.1} parent=39 // pred_region
          %s521 = smul.u32 2, %s28
          %523 = vsyncadd %s514, 0
          %s524 = smul.addr %s27, 2
          %s525 = sadd.s32 %s521, %s524
          %s526 = smul.addr %s525, 8
          %s527 = scalar_lea.hbm %s5, %s526
          %s529 = sshll.u32 %s517, 4
          %s530 = int_to_ptr.vmem [resolvable:$true] %s529
          %s531 = sshll.u32 %s527, 4
          %s532 = int_to_ptr.hbm [resolvable:$true] %s531
          %534 = dma.vmem_to_hbm [thread:$0]  %s530, 256, %s532, %s514
        $region56: #{prenorm_linear.1} parent=39 // pred_fallthru
          _
      $region40: #{prenorm_linear.1} parent=5 // pred_fallthru
        _
      %p535 = scmp.le.s32.totalorder 2, %s18
      // Predicated region
      $region57: #{prenorm_linear.1} parent=5 // pred_check
        %p536 = pneg %p535
      $region58: #{prenorm_linear.1} parent=5 // pred_check_branch
        %538 = sbr.rel (%p536) target = $region60
      $region59: #{prenorm_linear.1} parent=5 // pred_region
        %s539 = ssub.s32 %s18, 2
        // Predicated region
        $region61: #{prenorm_linear.1} parent=59 // pred_check
          %p540 = pneg %p181
        $region62: #{prenorm_linear.1} parent=59 // pred_check_branch
          %542 = sbr.rel (%p540) target = $region64
        $region63: #{prenorm_linear.1} parent=59 // pred_region
          %s543 = sand.u32 %s166, 1
          %s544 = scalar_lea.sflag [#allocation5], %s543
          %s545 = sand.u32 %s166, 1
          %s546 = smul.addr %s545, 16
          %s547 = scalar_lea.vmem [#allocation8], %s546
          %549 = dma.done %s544, 256
        $region64: #{prenorm_linear.1} parent=59 // pred_fallthru
          _
      $region60: #{prenorm_linear.1} parent=5 // pred_fallthru
        _
    $region6: #{prenorm_linear.1} parent=1 // loop_footer
      %s22 = sadd.s32 1, %s18
    $region7: #{prenorm_linear.1} parent=1 // loop_footer_branch
      %17 = sbr.rel target = $region3
    $region8: #{prenorm_linear.1} parent=1 // loop_exit
      _
    %550 = vsyncpa [#allocation4], 1
    %s551 = scalar_lea.sflag [#allocation4], 1
    %552 = vsyncpa %s551, 1
    %553 = vsyncpa [#allocation7], 1
    %554 = vsyncpa [#allocation5], 1
    %s555 = scalar_lea.sflag [#allocation5], 1
    %556 = vsyncpa %s555, 1

</llo_original>
